<compile_context>
chip_gen: v7x
topology: tpu7x:2x2x1
jax: 0.10.0
libtpu: 0.0.40
codegen_flags: <defaults>
</compile_context>

<pallas_src>
import functools

import jax
import jax.numpy as jnp
from jax.experimental import pallas as pl
from jax.experimental.pallas import tpu as pltpu

HIDDEN = 512    # fixed by the module definition
LANE = 128      # TPU lane width
SUBLANE = 8


def _round_up(x, m):
    return (x + m - 1) // m * m


def _ae_kernel(x_ref,
               w1_ref, b1_ref,   # encoder Linear(input_dim, 512)
               w2_ref, b2_ref,   # encoder Linear(512, latent_dim)
               w3_ref, b3_ref,   # decoder Linear(latent_dim, 512)
               w4_ref, b4_ref,   # decoder Linear(512, input_dim)
               enc_ref, dec_ref):
    bf16 = jnp.bfloat16
    x = x_ref[...].astype(bf16)

    # ---- encoder ----
    h1 = jnp.dot(x, w1_ref[...], preferred_element_type=jnp.float32) + b1_ref[...]
    h1 = jnp.maximum(h1, 0.0)                                        # ReLU (f32 VPU)
    enc = jnp.dot(h1.astype(bf16), w2_ref[...],
                  preferred_element_type=jnp.float32) + b2_ref[...]
    enc_ref[...] = enc.astype(enc_ref.dtype)

    # ---- decoder ----
    h2 = jnp.dot(enc.astype(bf16), w3_ref[...],
                 preferred_element_type=jnp.float32) + b3_ref[...]
    h2 = jnp.maximum(h2, 0.0)                                        # ReLU (f32 VPU)
    logits = jnp.dot(h2.astype(bf16), w4_ref[...],
                     preferred_element_type=jnp.float32) + b4_ref[...]
    dec_ref[...] = jax.nn.sigmoid(logits).astype(dec_ref.dtype)      # Sigmoid (f32 EUP)


@functools.partial(jax.jit, static_argnames=("tile_b", "dec_dtype"))
def autoencoder_forward(x, params, *, tile_b=256, dec_dtype=jnp.float32):
    """Fused autoencoder forward. Returns (encoded, decoded)."""
    w1, b1, w2, b2, w3, b3, w4, b4 = params
    B, input_dim = x.shape
    hidden = w1.shape[1]
    latent_dim = w2.shape[1]

    # Lane-dense feature padding and MXU-friendly batch tile.
    in_p = _round_up(input_dim, LANE)
    lat_p = _round_up(latent_dim, LANE)
    tb = min(tile_b, _round_up(B, SUBLANE))
    B_p = _round_up(B, tb)
    grid = (B_p // tb,)

    f32, bf16 = jnp.float32, jnp.bfloat16

    # Zero padding is inert: padded x-columns hit zero w1 rows, padded latent
    # columns are 0 and hit zero w3 rows, padded dec columns are sliced off.
    xp  = jnp.pad(x.astype(f32), ((0, B_p - B), (0, in_p - input_dim)))
    w1p = jnp.pad(w1.astype(bf16), ((0, in_p - input_dim), (0, 0)))
    b1p = b1.astype(f32)
    w2p = jnp.pad(w2.astype(bf16), ((0, 0), (0, lat_p - latent_dim)))
    b2p = jnp.pad(b2.astype(f32), ((0, 0), (0, lat_p - latent_dim)))
    w3p = jnp.pad(w3.astype(bf16), ((0, lat_p - latent_dim), (0, 0)))
    b3p = b3.astype(f32)
    w4p = jnp.pad(w4.astype(bf16), ((0, 0), (0, in_p - input_dim)))
    b4p = jnp.pad(b4.astype(f32), ((0, 0), (0, in_p - input_dim)))

    def batch_spec(feat):
        return pl.BlockSpec((tb, feat), lambda i: (i, 0))

    def resident(arr):
        return pl.BlockSpec(arr.shape, lambda i: (0, 0))

    in_specs = [batch_spec(in_p),
                resident(w1p), resident(b1p),
                resident(w2p), resident(b2p),
                resident(w3p), resident(b3p),
                resident(w4p), resident(b4p)]
    out_specs = (batch_spec(lat_p), batch_spec(in_p))
    out_shape = (jax.ShapeDtypeStruct((B_p, lat_p), jnp.float32),
                 jax.ShapeDtypeStruct((B_p, in_p), dec_dtype))

    dec_bytes = jnp.dtype(dec_dtype).itemsize
    w_elems = in_p * hidden + hidden * lat_p + lat_p * hidden + hidden * in_p
    b_elems = hidden + lat_p + hidden + in_p
    cost = pl.CostEstimate(
        flops=2 * B_p * w_elems,
        transcendentals=B_p * in_p,                       # sigmoid
        bytes_accessed=(B_p * in_p * 4                    # x in (f32)
                        + 2 * w_elems + 4 * b_elems       # bf16 weights, f32 biases
                        + B_p * lat_p * 4                 # enc out
                        + B_p * in_p * dec_bytes))        # dec out

    # VMEM budget: resident weights/biases (+buffer headroom), double-buffered
    # x/enc/dec tiles, plus f32 activation temporaries.
    weight_bytes = 2 * w_elems + 4 * b_elems
    io_bytes = 2 * tb * (in_p * 4 + lat_p * 4 + in_p * dec_bytes)
    act_bytes = 4 * tb * (2 * hidden + lat_p + in_p)
    vmem_limit = int(min(64 * 1024 * 1024,
                         max(32 * 1024 * 1024,
                             1.5 * (2 * weight_bytes + io_bytes + act_bytes))))
    # TODO(synk): for very large input_dim (>~2k), tile w1's K dim / w4's N dim on an
    # extra "arbitrary" grid axis (with a pl.when-initialized VMEM accumulator)
    # instead of holding them fully VMEM-resident.

    enc_p, dec_p = pl.pallas_call(
        _ae_kernel,
        grid=grid,
        in_specs=in_specs,
        out_specs=out_specs,
        out_shape=out_shape,
        compiler_params=pltpu.CompilerParams(
            dimension_semantics=("parallel",),   # megacore / 2-TC sharding on v7x
            vmem_limit_bytes=vmem_limit),
        cost_estimate=cost,
    )(xp, w1p, b1p, w2p, b2p, w3p, b3p, w4p, b4p)

    return enc_p[:B, :latent_dim], dec_p[:B, :input_dim]


def init_params(key, input_dim, latent_dim):
    """PyTorch-style uniform(-1/sqrt(fan_in), 1/sqrt(fan_in)) init.

    Weights stored as [in_features, out_features] in bf16 (MXU dtype);
    biases f32, shape [1, out_features] so they tile cleanly in VMEM."""
    def linear(k, fan_in, fan_out):
        kw, kb = jax.random.split(k)
        bound = 1.0 / jnp.sqrt(float(fan_in))
        w = jax.random.uniform(kw, (fan_in, fan_out), jnp.float32, -bound, bound)
        b = jax.random.uniform(kb, (1, fan_out), jnp.float32, -bound, bound)
        return w.astype(jnp.bfloat16), b

    k1, k2, k3, k4 = jax.random.split(key, 4)
    w1, b1 = linear(k1, input_dim, HIDDEN)
    w2, b2 = linear(k2, HIDDEN, latent_dim)
    w3, b3 = linear(k3, latent_dim, HIDDEN)
    w4, b4 = linear(k4, HIDDEN, input_dim)
    return (w1, b1, w2, b2, w3, b3, w4, b4)


def reference_forward(x, params):
    """Plain-JAX reference (same bf16-operand / f32-accumulate recipe as the kernel)."""
    w1, b1, w2, b2, w3, b3, w4, b4 = params
    bf16, f32 = jnp.bfloat16, jnp.float32
    h1 = jnp.maximum(jnp.dot(x.astype(bf16), w1, preferred_element_type=f32) + b1, 0.0)
    enc = jnp.dot(h1.astype(bf16), w2, preferred_element_type=f32) + b2
    h2 = jnp.maximum(jnp.dot(enc.astype(bf16), w3, preferred_element_type=f32) + b3, 0.0)
    dec = jax.nn.sigmoid(jnp.dot(h2.astype(bf16), w4, preferred_element_type=f32) + b4)
    return enc, dec


if __name__ == "__main__":
    B, INPUT_DIM, LATENT_DIM = 8, 32, 16

    key = jax.random.PRNGKey(0)
    kx, kp = jax.random.split(key)
    x = jax.random.normal(kx, (B, INPUT_DIM), jnp.float32)
    params = init_params(kp, INPUT_DIM, LATENT_DIM)

    enc, dec = autoencoder_forward(x, params)
    jax.block_until_ready((enc, dec))

    enc_ref, dec_ref = reference_forward(x, params)
    assert enc.shape == (B, LATENT_DIM) and dec.shape == (B, INPUT_DIM)
    assert jnp.allclose(enc, enc_ref, atol=2e-2, rtol=2e-2)
    assert jnp.allclose(dec, dec_ref, atol=2e-2, rtol=2e-2)

    print("KERNEL_OK")
</pallas_src>

<mosaic_0001>
module attributes {stable_mosaic.version = 11 : i64} {
  func.func @_ae_kernel(%arg0: i32, %arg1: memref<8x128xf32, #tpu.memory_space<vmem>>, %arg2: memref<128x512xbf16, #tpu.memory_space<vmem>>, %arg3: memref<1x512xf32, #tpu.memory_space<vmem>>, %arg4: memref<512x128xbf16, #tpu.memory_space<vmem>>, %arg5: memref<1x128xf32, #tpu.memory_space<vmem>>, %arg6: memref<128x512xbf16, #tpu.memory_space<vmem>>, %arg7: memref<1x512xf32, #tpu.memory_space<vmem>>, %arg8: memref<512x128xbf16, #tpu.memory_space<vmem>>, %arg9: memref<1x128xf32, #tpu.memory_space<vmem>>, %arg10: memref<8x128xf32, #tpu.memory_space<vmem>>, %arg11: memref<8x128xf32, #tpu.memory_space<vmem>>) attributes {dimension_semantics = [#tpu.dimension_semantics<parallel>], iteration_bounds = array<i64: 1>, scalar_prefetch = 0 : i64, scratch_operands = 0 : i64, tpu.core_type = #tpu.core_type<tc>, window_params = [{transform_indices = @transform_0, window_bounds = array<i64: 8, 128>}, {pipeline_mode = #tpu.pipeline_mode<synchronous>, transform_indices = @transform_1, window_bounds = array<i64: 128, 512>}, {pipeline_mode = #tpu.pipeline_mode<synchronous>, transform_indices = @transform_2, window_bounds = array<i64: 1, 512>}, {pipeline_mode = #tpu.pipeline_mode<synchronous>, transform_indices = @transform_3, window_bounds = array<i64: 512, 128>}, {pipeline_mode = #tpu.pipeline_mode<synchronous>, transform_indices = @transform_4, window_bounds = array<i64: 1, 128>}, {pipeline_mode = #tpu.pipeline_mode<synchronous>, transform_indices = @transform_5, window_bounds = array<i64: 128, 512>}, {pipeline_mode = #tpu.pipeline_mode<synchronous>, transform_indices = @transform_6, window_bounds = array<i64: 1, 512>}, {pipeline_mode = #tpu.pipeline_mode<synchronous>, transform_indices = @transform_7, window_bounds = array<i64: 512, 128>}, {pipeline_mode = #tpu.pipeline_mode<synchronous>, transform_indices = @transform_8, window_bounds = array<i64: 1, 128>}, {transform_indices = @transform_9, window_bounds = array<i64: 8, 128>}, {transform_indices = @transform_10, window_bounds = array<i64: 8, 128>}]} {
    %c0 = arith.constant 0 : index
    %c0_0 = arith.constant 0 : index
    %0 = vector.load %arg1[%c0, %c0_0] : memref<8x128xf32, #tpu.memory_space<vmem>>, vector<8x128xf32>
    %1 = arith.truncf %0 : vector<8x128xf32> to vector<8x128xbf16>
    %c0_1 = arith.constant 0 : index
    %c0_2 = arith.constant 0 : index
    %2 = vector.load %arg2[%c0_1, %c0_2] : memref<128x512xbf16, #tpu.memory_space<vmem>>, vector<128x512xbf16>
    %cst = arith.constant dense<0.000000e+00> : vector<8x512xf32>
    %3 = tpu.matmul %1, %2, %cst {dimension_numbers = #tpu.dot_dimension_numbers<[1], [0], [0], [1], [0, 0, 1, 1], [], []>} : vector<8x128xbf16>, vector<128x512xbf16>, vector<8x512xf32> -> vector<8x512xf32>
    %c0_3 = arith.constant 0 : index
    %c0_4 = arith.constant 0 : index
    %4 = vector.load %arg3[%c0_3, %c0_4] : memref<1x512xf32, #tpu.memory_space<vmem>>, vector<1x512xf32>
    %5 = vector.broadcast %4 : vector<1x512xf32> to vector<8x512xf32>
    %6 = arith.addf %3, %5 : vector<8x512xf32>
    %cst_5 = arith.constant 0.000000e+00 : f32
    %7 = vector.broadcast %cst_5 : f32 to vector<8x512xf32>
    %8 = arith.maximumf %6, %7 : vector<8x512xf32>
    %9 = arith.truncf %8 : vector<8x512xf32> to vector<8x512xbf16>
    %c0_6 = arith.constant 0 : index
    %c0_7 = arith.constant 0 : index
    %10 = vector.load %arg4[%c0_6, %c0_7] : memref<512x128xbf16, #tpu.memory_space<vmem>>, vector<512x128xbf16>
    %cst_8 = arith.constant dense<0.000000e+00> : vector<8x128xf32>
    %11 = tpu.matmul %9, %10, %cst_8 {dimension_numbers = #tpu.dot_dimension_numbers<[1], [0], [0], [1], [0, 0, 1, 1], [], []>} : vector<8x512xbf16>, vector<512x128xbf16>, vector<8x128xf32> -> vector<8x128xf32>
    %c0_9 = arith.constant 0 : index
    %c0_10 = arith.constant 0 : index
    %12 = vector.load %arg5[%c0_9, %c0_10] : memref<1x128xf32, #tpu.memory_space<vmem>>, vector<1x128xf32>
    %13 = vector.broadcast %12 : vector<1x128xf32> to vector<8x128xf32>
    %14 = arith.addf %11, %13 : vector<8x128xf32>
    %c0_11 = arith.constant 0 : index
    %c0_12 = arith.constant 0 : index
    %15 = vector.load %arg10[%c0_11, %c0_12] : memref<8x128xf32, #tpu.memory_space<vmem>>, vector<8x128xf32>
    tpu.vector_store %arg10[%c0_11, %c0_12], %14 {strides = array<i32>} : memref<8x128xf32, #tpu.memory_space<vmem>>, vector<8x128xf32>,
    %16 = arith.truncf %14 : vector<8x128xf32> to vector<8x128xbf16>
    %c0_13 = arith.constant 0 : index
    %c0_14 = arith.constant 0 : index
    %17 = vector.load %arg6[%c0_13, %c0_14] : memref<128x512xbf16, #tpu.memory_space<vmem>>, vector<128x512xbf16>
    %cst_15 = arith.constant dense<0.000000e+00> : vector<8x512xf32>
    %18 = tpu.matmul %16, %17, %cst_15 {dimension_numbers = #tpu.dot_dimension_numbers<[1], [0], [0], [1], [0, 0, 1, 1], [], []>} : vector<8x128xbf16>, vector<128x512xbf16>, vector<8x512xf32> -> vector<8x512xf32>
    %c0_16 = arith.constant 0 : index
    %c0_17 = arith.constant 0 : index
    %19 = vector.load %arg7[%c0_16, %c0_17] : memref<1x512xf32, #tpu.memory_space<vmem>>, vector<1x512xf32>
    %20 = vector.broadcast %19 : vector<1x512xf32> to vector<8x512xf32>
    %21 = arith.addf %18, %20 : vector<8x512xf32>
    %cst_18 = arith.constant 0.000000e+00 : f32
    %22 = vector.broadcast %cst_18 : f32 to vector<8x512xf32>
    %23 = arith.maximumf %21, %22 : vector<8x512xf32>
    %24 = arith.truncf %23 : vector<8x512xf32> to vector<8x512xbf16>
    %c0_19 = arith.constant 0 : index
    %c0_20 = arith.constant 0 : index
    %25 = vector.load %arg8[%c0_19, %c0_20] : memref<512x128xbf16, #tpu.memory_space<vmem>>, vector<512x128xbf16>
    %cst_21 = arith.constant dense<0.000000e+00> : vector<8x128xf32>
    %26 = tpu.matmul %24, %25, %cst_21 {dimension_numbers = #tpu.dot_dimension_numbers<[1], [0], [0], [1], [0, 0, 1, 1], [], []>} : vector<8x512xbf16>, vector<512x128xbf16>, vector<8x128xf32> -> vector<8x128xf32>
    %c0_22 = arith.constant 0 : index
    %c0_23 = arith.constant 0 : index
    %27 = vector.load %arg9[%c0_22, %c0_23] : memref<1x128xf32, #tpu.memory_space<vmem>>, vector<1x128xf32>
    %28 = vector.broadcast %27 : vector<1x128xf32> to vector<8x128xf32>
    %29 = arith.addf %26, %28 : vector<8x128xf32>
    %30 = arith.negf %29 : vector<8x128xf32>
    %31 = math.exp %30 : vector<8x128xf32>
    %cst_24 = arith.constant 1.000000e+00 : f32
    %32 = vector.broadcast %cst_24 : f32 to vector<8x128xf32>
    %33 = arith.addf %32, %31 : vector<8x128xf32>
    %34 = arith.divf %32, %33 : vector<8x128xf32>
    %c0_25 = arith.constant 0 : index
    %c0_26 = arith.constant 0 : index
    %35 = vector.load %arg11[%c0_25, %c0_26] : memref<8x128xf32, #tpu.memory_space<vmem>>, vector<8x128xf32>
    tpu.vector_store %arg11[%c0_25, %c0_26], %34 {strides = array<i32>} : memref<8x128xf32, #tpu.memory_space<vmem>>, vector<8x128xf32>,
    return
  }
  func.func @transform_0(%arg0: i32) -> (i32, i32) {
    %c0_i32 = arith.constant 0 : i32
    %c0_i32_0 = arith.constant 0 : i32
    return %arg0, %c0_i32 : i32, i32
  }
  func.func @transform_1(%arg0: i32) -> (i32, i32) {
    %c0_i32 = arith.constant 0 : i32
    %c0_i32_0 = arith.constant 0 : i32
    %c0_i32_1 = arith.constant 0 : i32
    return %c0_i32, %c0_i32_0 : i32, i32
  }
  func.func @transform_2(%arg0: i32) -> (i32, i32) {
    %c0_i32 = arith.constant 0 : i32
    %c0_i32_0 = arith.constant 0 : i32
    %c0_i32_1 = arith.constant 0 : i32
    return %c0_i32, %c0_i32_0 : i32, i32
  }
  func.func @transform_3(%arg0: i32) -> (i32, i32) {
    %c0_i32 = arith.constant 0 : i32
    %c0_i32_0 = arith.constant 0 : i32
    %c0_i32_1 = arith.constant 0 : i32
    return %c0_i32, %c0_i32_0 : i32, i32
  }
  func.func @transform_4(%arg0: i32) -> (i32, i32) {
    %c0_i32 = arith.constant 0 : i32
    %c0_i32_0 = arith.constant 0 : i32
    %c0_i32_1 = arith.constant 0 : i32
    return %c0_i32, %c0_i32_0 : i32, i32
  }
  func.func @transform_5(%arg0: i32) -> (i32, i32) {
    %c0_i32 = arith.constant 0 : i32
    %c0_i32_0 = arith.constant 0 : i32
    %c0_i32_1 = arith.constant 0 : i32
    return %c0_i32, %c0_i32_0 : i32, i32
  }
  func.func @transform_6(%arg0: i32) -> (i32, i32) {
    %c0_i32 = arith.constant 0 : i32
    %c0_i32_0 = arith.constant 0 : i32
    %c0_i32_1 = arith.constant 0 : i32
    return %c0_i32, %c0_i32_0 : i32, i32
  }
  func.func @transform_7(%arg0: i32) -> (i32, i32) {
    %c0_i32 = arith.constant 0 : i32
    %c0_i32_0 = arith.constant 0 : i32
    %c0_i32_1 = arith.constant 0 : i32
    return %c0_i32, %c0_i32_0 : i32, i32
  }
  func.func @transform_8(%arg0: i32) -> (i32, i32) {
    %c0_i32 = arith.constant 0 : i32
    %c0_i32_0 = arith.constant 0 : i32
    %c0_i32_1 = arith.constant 0 : i32
    return %c0_i32, %c0_i32_0 : i32, i32
  }
  func.func @transform_9(%arg0: i32) -> (i32, i32) {
    %c0_i32 = arith.constant 0 : i32
    %c0_i32_0 = arith.constant 0 : i32
    return %arg0, %c0_i32 : i32, i32
  }
  func.func @transform_10(%arg0: i32) -> (i32, i32) {
    %c0_i32 = arith.constant 0 : i32
    %c0_i32_0 = arith.constant 0 : i32
    return %arg0, %c0_i32 : i32, i32
  }
}

</mosaic_0001>

<llo_original>
// kernel: autoencoder_forward.1
$region0: #{autoencoder_forward.1}
  #allocation0 [shape = 'u32[]', space=smem, size = 0x4, offset = 0x4, fixed_abs, tag = 'smem constant byte address 0x4 - core index']
  #allocation1 [shape = 'u32[144,128]{1,0:T(1,128)}', space=vmem, size = 0x12000, scoped, tag = 'internal scratch']
  %s0 = inlined_call_operand.vmem [shape: f32[8,128], index: 0, kind: input, shape index: {}]
  %s1 = inlined_call_operand.vmem [shape: bf16[128,512], index: 1, kind: input, shape index: {}]
  %s2 = inlined_call_operand.vmem [shape: f32[1,512], index: 2, kind: input, shape index: {}]
  %s3 = inlined_call_operand.vmem [shape: bf16[512,128], index: 3, kind: input, shape index: {}]
  %s4 = inlined_call_operand.vmem [shape: f32[1,128], index: 4, kind: input, shape index: {}]
  %s5 = inlined_call_operand.vmem [shape: bf16[128,512], index: 5, kind: input, shape index: {}]
  %s6 = inlined_call_operand.vmem [shape: f32[1,512], index: 6, kind: input, shape index: {}]
  %s7 = inlined_call_operand.vmem [shape: bf16[512,128], index: 7, kind: input, shape index: {}]
  %s8 = inlined_call_operand.vmem [shape: f32[1,128], index: 8, kind: input, shape index: {}]
  %s9 = inlined_call_operand.hbm [shape: f32[8,128], index: 9, kind: output, shape index: {0}]
  %s10 = inlined_call_operand.hbm [shape: f32[8,128], index: 10, kind: output, shape index: {1}]
  %11 = xla_tuple %s9, %s10
  %s12 = sld [smem:[#allocation0]]
  $region54: #{autoencoder_forward.1} parent=0
    _
  %s14 = ssub.s32 1, %s12
  %s15 = scalar_select 0, %s14, %s12
  $region1: #{autoencoder_forward.1} parent=0
    #allocation2 [shape = 'u8[4096]{0}', space=vmem, size = 0x1000, scoped, tag = 'output window, operand 0, single buffered']
    #allocation3 [shape = 's32[1]{0}', space=sflag, size = 0x4, scoped, tag = 'scoped memory for autoencoder_forward.1']
    #allocation4 [shape = 'u8[4096]{0}', space=vmem, size = 0x1000, scoped, tag = 'output window, operand 1, single buffered']
    #allocation5 [shape = 's32[1]{0}', space=sflag, size = 0x4, scoped, tag = 'scoped memory for autoencoder_forward.1']
    %16 = vsyncpa [#allocation3], 0
    %17 = vsyncpa [#allocation5], 0
    // Predicated region
    $region2: #{autoencoder_forward.1} parent=1 // pred_check
      _
    $region3: #{autoencoder_forward.1} parent=1 // pred_check_branch
      %19 = sbr.rel (0) target = $region5
    $region4: #{autoencoder_forward.1} parent=1 // pred_region
      _
    $region5: #{autoencoder_forward.1} parent=1 // pred_fallthru
      _
    // Predicated region
    $region6: #{autoencoder_forward.1} parent=1 // pred_check
      _
    $region7: #{autoencoder_forward.1} parent=1 // pred_check_branch
      %21 = sbr.rel (0) target = $region9
    $region8: #{autoencoder_forward.1} parent=1 // pred_region
      _
    $region9: #{autoencoder_forward.1} parent=1 // pred_fallthru
      _
    // Predicated region
    $region10: #{autoencoder_forward.1} parent=1 // pred_check
      _
    $region11: #{autoencoder_forward.1} parent=1 // pred_check_branch
      %23 = sbr.rel (0) target = $region13
    $region12: #{autoencoder_forward.1} parent=1 // pred_region
      _
    $region13: #{autoencoder_forward.1} parent=1 // pred_fallthru
      _
    // Predicated region
    $region14: #{autoencoder_forward.1} parent=1 // pred_check
      _
    $region15: #{autoencoder_forward.1} parent=1 // pred_check_branch
      %25 = sbr.rel (0) target = $region17
    $region16: #{autoencoder_forward.1} parent=1 // pred_region
      _
    $region17: #{autoencoder_forward.1} parent=1 // pred_fallthru
      _
    // Predicated region
    $region18: #{autoencoder_forward.1} parent=1 // pred_check
      _
    $region19: #{autoencoder_forward.1} parent=1 // pred_check_branch
      %27 = sbr.rel (0) target = $region21
    $region20: #{autoencoder_forward.1} parent=1 // pred_region
      _
    $region21: #{autoencoder_forward.1} parent=1 // pred_fallthru
      _
    // Predicated region
    $region22: #{autoencoder_forward.1} parent=1 // pred_check
      _
    $region23: #{autoencoder_forward.1} parent=1 // pred_check_branch
      %29 = sbr.rel (0) target = $region25
    $region24: #{autoencoder_forward.1} parent=1 // pred_region
      _
    $region25: #{autoencoder_forward.1} parent=1 // pred_fallthru
      _
    // Predicated region
    $region26: #{autoencoder_forward.1} parent=1 // pred_check
      _
    $region27: #{autoencoder_forward.1} parent=1 // pred_check_branch
      %31 = sbr.rel (0) target = $region29
    $region28: #{autoencoder_forward.1} parent=1 // pred_region
      _
    $region29: #{autoencoder_forward.1} parent=1 // pred_fallthru
      _
    // Predicated region
    $region30: #{autoencoder_forward.1} parent=1 // pred_check
      _
    $region31: #{autoencoder_forward.1} parent=1 // pred_check_branch
      %33 = sbr.rel (0) target = $region33
    $region32: #{autoencoder_forward.1} parent=1 // pred_region
      _
    $region33: #{autoencoder_forward.1} parent=1 // pred_fallthru
      _
    // Predicated region
    $region34: #{autoencoder_forward.1} parent=1 // pred_check
      _
    $region35: #{autoencoder_forward.1} parent=1 // pred_check_branch
      %35 = sbr.rel (0) target = $region37
    $region36: #{autoencoder_forward.1} parent=1 // pred_region
      _
    $region37: #{autoencoder_forward.1} parent=1 // pred_fallthru
      _
    %v37 = vld [vmem:[%s0] sm:$0xff]
    %v38 = vpack.c.bf16 %v37, %v37
    %v39 = vld [vmem:[%s1] sm:$0xff]
    %v40 = vld [vmem:[%s1 + $0x8] sm:$0xff]
    %v41 = vld [vmem:[%s1 + $0x10] sm:$0xff]
    %v42 = vld [vmem:[%s1 + $0x18] sm:$0xff]
    %v43 = vld [vmem:[%s1 + $0x20] sm:$0xff]
    %v44 = vld [vmem:[%s1 + $0x28] sm:$0xff]
    %v45 = vld [vmem:[%s1 + $0x30] sm:$0xff]
    %v46 = vld [vmem:[%s1 + $0x38] sm:$0xff]
    %v47 = vld [vmem:[%s1 + $0x40] sm:$0xff]
    %v48 = vld [vmem:[%s1 + $0x48] sm:$0xff]
    %v49 = vld [vmem:[%s1 + $0x50] sm:$0xff]
    %v50 = vld [vmem:[%s1 + $0x58] sm:$0xff]
    %v51 = vld [vmem:[%s1 + $0x60] sm:$0xff]
    %v52 = vld [vmem:[%s1 + $0x68] sm:$0xff]
    %v53 = vld [vmem:[%s1 + $0x70] sm:$0xff]
    %v54 = vld [vmem:[%s1 + $0x78] sm:$0xff]
    %v55 = vld [vmem:[%s1 + $0x80] sm:$0xff]
    %v56 = vld [vmem:[%s1 + $0x88] sm:$0xff]
    %v57 = vld [vmem:[%s1 + $0x90] sm:$0xff]
    %v58 = vld [vmem:[%s1 + $0x98] sm:$0xff]
    %v59 = vld [vmem:[%s1 + $0xa0] sm:$0xff]
    %v60 = vld [vmem:[%s1 + $0xa8] sm:$0xff]
    %v61 = vld [vmem:[%s1 + $0xb0] sm:$0xff]
    %v62 = vld [vmem:[%s1 + $0xb8] sm:$0xff]
    %v63 = vld [vmem:[%s1 + $0xc0] sm:$0xff]
    %v64 = vld [vmem:[%s1 + $0xc8] sm:$0xff]
    %v65 = vld [vmem:[%s1 + $0xd0] sm:$0xff]
    %v66 = vld [vmem:[%s1 + $0xd8] sm:$0xff]
    %v67 = vld [vmem:[%s1 + $0xe0] sm:$0xff]
    %v68 = vld [vmem:[%s1 + $0xe8] sm:$0xff]
    %v69 = vld [vmem:[%s1 + $0xf0] sm:$0xff]
    %v70 = vld [vmem:[%s1 + $0xf8] sm:$0xff]
    %v71 = vld [vmem:[%s2] sm:$0xf]
    %v73 = vlaneseq
    %v74 = vshrl.u32 %v73, 7
    %v75 = vsub.s32 0, %v74
    %v76 = vrot.slane %v71, %v75
    %v77 = vlaneseq
    %v78 = vshrl.u32 %v77, 7
    %v79 = vsub.s32 1, %v78
    %v80 = vrot.slane %v71, %v79
    %v81 = vlaneseq
    %v82 = vshrl.u32 %v81, 7
    %v83 = vsub.s32 2, %v82
    %v84 = vrot.slane %v71, %v83
    %v85 = vlaneseq
    %v86 = vshrl.u32 %v85, 7
    %v87 = vsub.s32 3, %v86
    %v88 = vrot.slane %v71, %v87
    %v125 = vunpack.c.l.b16 %v39
    %v126 = vunpack.c.h.b16 %v39
    %v127 = vunpack.c.l.b16 %v40
    %v128 = vunpack.c.h.b16 %v40
    %v129 = vunpack.c.l.b16 %v41
    %v130 = vunpack.c.h.b16 %v41
    %v131 = vunpack.c.l.b16 %v42
    %v132 = vunpack.c.h.b16 %v42
    %v133 = vunpack.c.l.b16 %v43
    %v134 = vunpack.c.h.b16 %v43
    %v135 = vunpack.c.l.b16 %v44
    %v136 = vunpack.c.h.b16 %v44
    %v137 = vunpack.c.l.b16 %v45
    %v138 = vunpack.c.h.b16 %v45
    %v139 = vunpack.c.l.b16 %v46
    %v140 = vunpack.c.h.b16 %v46
    %v141 = vunpack.c.l.b16 %v47
    %v142 = vunpack.c.h.b16 %v47
    %v143 = vunpack.c.l.b16 %v48
    %v144 = vunpack.c.h.b16 %v48
    %v145 = vunpack.c.l.b16 %v49
    %v146 = vunpack.c.h.b16 %v49
    %v147 = vunpack.c.l.b16 %v50
    %v148 = vunpack.c.h.b16 %v50
    %v149 = vunpack.c.l.b16 %v51
    %v150 = vunpack.c.h.b16 %v51
    %v151 = vunpack.c.l.b16 %v52
    %v152 = vunpack.c.h.b16 %v52
    %v153 = vunpack.c.l.b16 %v53
    %v154 = vunpack.c.h.b16 %v53
    %v155 = vunpack.c.l.b16 %v54
    %v156 = vunpack.c.h.b16 %v54
    %v157 = vunpack.c.l.b16 %v55
    %v158 = vunpack.c.h.b16 %v55
    %v159 = vunpack.c.l.b16 %v56
    %v160 = vunpack.c.h.b16 %v56
    %v161 = vunpack.c.l.b16 %v57
    %v162 = vunpack.c.h.b16 %v57
    %v163 = vunpack.c.l.b16 %v58
    %v164 = vunpack.c.h.b16 %v58
    %v165 = vunpack.c.l.b16 %v59
    %v166 = vunpack.c.h.b16 %v59
    %v167 = vunpack.c.l.b16 %v60
    %v168 = vunpack.c.h.b16 %v60
    %v169 = vunpack.c.l.b16 %v61
    %v170 = vunpack.c.h.b16 %v61
    %v171 = vunpack.c.l.b16 %v62
    %v172 = vunpack.c.h.b16 %v62
    %v173 = vunpack.c.l.b16 %v63
    %v174 = vunpack.c.h.b16 %v63
    %v175 = vunpack.c.l.b16 %v64
    %v176 = vunpack.c.h.b16 %v64
    %v177 = vunpack.c.l.b16 %v65
    %v178 = vunpack.c.h.b16 %v65
    %v179 = vunpack.c.l.b16 %v66
    %v180 = vunpack.c.h.b16 %v66
    %v181 = vunpack.c.l.b16 %v67
    %v182 = vunpack.c.h.b16 %v67
    %v183 = vunpack.c.l.b16 %v68
    %v184 = vunpack.c.h.b16 %v68
    %v185 = vunpack.c.l.b16 %v69
    %v186 = vunpack.c.h.b16 %v69
    %v187 = vunpack.c.l.b16 %v70
    %v188 = vunpack.c.h.b16 %v70
    %v189 = vpack.c.b16 %v129, %v125
    %v190 = vpack.c.b16 %v130, %v126
    %v191 = vpack.c.b16 %v131, %v127
    %v192 = vpack.c.b16 %v132, %v128
    %v193 = vpack.c.b16 %v137, %v133
    %v194 = vpack.c.b16 %v138, %v134
    %v195 = vpack.c.b16 %v139, %v135
    %v196 = vpack.c.b16 %v140, %v136
    %v197 = vpack.c.b16 %v145, %v141
    %v198 = vpack.c.b16 %v146, %v142
    %v199 = vpack.c.b16 %v147, %v143
    %v200 = vpack.c.b16 %v148, %v144
    %v201 = vpack.c.b16 %v153, %v149
    %v202 = vpack.c.b16 %v154, %v150
    %v203 = vpack.c.b16 %v155, %v151
    %v204 = vpack.c.b16 %v156, %v152
    %v205 = vpack.c.b16 %v161, %v157
    %v206 = vpack.c.b16 %v162, %v158
    %v207 = vpack.c.b16 %v163, %v159
    %v208 = vpack.c.b16 %v164, %v160
    %v209 = vpack.c.b16 %v169, %v165
    %v210 = vpack.c.b16 %v170, %v166
    %v211 = vpack.c.b16 %v171, %v167
    %v212 = vpack.c.b16 %v172, %v168
    %v213 = vpack.c.b16 %v177, %v173
    %v214 = vpack.c.b16 %v178, %v174
    %v215 = vpack.c.b16 %v179, %v175
    %v216 = vpack.c.b16 %v180, %v176
    %v217 = vpack.c.b16 %v185, %v181
    %v218 = vpack.c.b16 %v186, %v182
    %v219 = vpack.c.b16 %v187, %v183
    %v220 = vpack.c.b16 %v188, %v184
    %253 = vmatprep.subr.bf16.mxu0 %v190
    %254 = vmatpush1.bf16.msra.mxu0 %v189
    %255 = vmatprep.subr.bf16.mxu0 %v194
    %256 = vmatpush1.bf16.msra.mxu0 %v193
    %257 = vmatprep.subr.bf16.mxu0 %v198
    %258 = vmatpush1.bf16.msra.mxu0 %v197
    %259 = vmatprep.subr.bf16.mxu0 %v202
    %260 = vmatpush1.bf16.msra.mxu0 %v201
    %261 = vmatprep.subr.bf16.mxu0 %v206
    %262 = vmatpush1.bf16.msra.mxu0 %v205
    %263 = vmatprep.subr.bf16.mxu0 %v210
    %264 = vmatpush1.bf16.msra.mxu0 %v209
    %265 = vmatprep.subr.bf16.mxu0 %v214
    %266 = vmatpush1.bf16.msra.mxu0 %v213
    %267 = vmatprep.subr.bf16.mxu0 %v218
    %268 = vmatpush1.bf16.msra.mxu0 %v217
    %269 = vmatprep.subr.bf16.mxu0 0
    %270 = vmatpush1.bf16.msra.mxu0 0
    %271 = vmatprep.subr.bf16.mxu0 0
    %272 = vmatpush1.bf16.msra.mxu0 0
    %273 = vmatprep.subr.bf16.mxu0 0
    %274 = vmatpush1.bf16.msra.mxu0 0
    %275 = vmatprep.subr.bf16.mxu0 0
    %276 = vmatpush1.bf16.msra.mxu0 0
    %277 = vmatprep.subr.bf16.mxu0 0
    %278 = vmatpush1.bf16.msra.mxu0 0
    %279 = vmatprep.subr.bf16.mxu0 0
    %280 = vmatpush1.bf16.msra.mxu0 0
    %281 = vmatprep.subr.bf16.mxu0 0
    %282 = vmatpush1.bf16.msra.mxu0 0
    %283 = vmatprep.subr.bf16.mxu0 0
    %284 = vmatpush1.bf16.msra.mxu0 0
    %285 = vmatprep.mubr.bf16.mxu0 0
    %286 = vmatmul.mubr.bf16.gmra.mrb[0].mxu0 %v38
    %v287 = vpop.f32.mrb[0].mxu0
    %v288 = vadd.f32 %v76, %v287
    %v289 = vpop.f32.mrb[0].mxu0
    %v290 = vadd.f32 %v80, %v289
    %v291 = vpop.f32.mrb[0].mxu0
    %v292 = vpop.f32.mrb[0].mxu0
    %293 = vdwg.mxu0
    %294 = vmatprep.subr.bf16.mxu0 %v192
    %295 = vmatpush1.bf16.msra.mxu0 %v191
    %296 = vmatprep.subr.bf16.mxu0 %v196
    %297 = vmatpush1.bf16.msra.mxu0 %v195
    %298 = vmatprep.subr.bf16.mxu0 %v200
    %299 = vmatpush1.bf16.msra.mxu0 %v199
    %300 = vmatprep.subr.bf16.mxu0 %v204
    %301 = vmatpush1.bf16.msra.mxu0 %v203
    %302 = vmatprep.subr.bf16.mxu0 %v208
    %303 = vmatpush1.bf16.msra.mxu0 %v207
    %304 = vmatprep.subr.bf16.mxu0 %v212
    %305 = vmatpush1.bf16.msra.mxu0 %v211
    %306 = vmatprep.subr.bf16.mxu0 %v216
    %307 = vmatpush1.bf16.msra.mxu0 %v215
    %308 = vmatprep.subr.bf16.mxu0 %v220
    %309 = vmatpush1.bf16.msra.mxu0 %v219
    %310 = vmatprep.subr.bf16.mxu0 0
    %311 = vmatpush1.bf16.msra.mxu0 0
    %312 = vmatprep.subr.bf16.mxu0 0
    %313 = vmatpush1.bf16.msra.mxu0 0
    %314 = vmatprep.subr.bf16.mxu0 0
    %315 = vmatpush1.bf16.msra.mxu0 0
    %316 = vmatprep.subr.bf16.mxu0 0
    %317 = vmatpush1.bf16.msra.mxu0 0
    %318 = vmatprep.subr.bf16.mxu0 0
    %319 = vmatpush1.bf16.msra.mxu0 0
    %320 = vmatprep.subr.bf16.mxu0 0
    %321 = vmatpush1.bf16.msra.mxu0 0
    %322 = vmatprep.subr.bf16.mxu0 0
    %323 = vmatpush1.bf16.msra.mxu0 0
    %324 = vmatprep.subr.bf16.mxu0 0
    %325 = vmatpush1.bf16.msra.mxu0 0
    %326 = vmatprep.mubr.bf16.mxu0 0
    %327 = vmatmul.mubr.bf16.gmra.mrb[0].mxu0 %v38
    %v328 = vpop.f32.mrb[0].mxu0
    %v329 = vadd.f32 %v84, %v328
    %v330 = vpop.f32.mrb[0].mxu0
    %v331 = vadd.f32 %v88, %v330
    %v332 = vpop.f32.mrb[0].mxu0
    %v333 = vpop.f32.mrb[0].mxu0
    %334 = vdwg.mxu0
    %v335 = vmax.f32 %v288, 0.0
    %v336 = vmax.f32 %v290, 0.0
    %v337 = vmax.f32 %v329, 0.0
    %v338 = vmax.f32 %v331, 0.0
    %v339 = vpack.c.bf16 %v335, %v335
    %v340 = vpack.c.bf16 %v336, %v336
    %v341 = vpack.c.bf16 %v337, %v337
    %v342 = vpack.c.bf16 %v338, %v338
    %v343 = vld [vmem:[%s3] sm:$0xf]
    %v344 = vld [vmem:[%s3 + $0x4] sm:$0xf]
    %v345 = vld [vmem:[%s3 + $0x8] sm:$0xf]
    %v346 = vld [vmem:[%s3 + $0xc] sm:$0xf]
    %v347 = vld [vmem:[%s3 + $0x10] sm:$0xf]
    %v348 = vld [vmem:[%s3 + $0x14] sm:$0xf]
    %v349 = vld [vmem:[%s3 + $0x18] sm:$0xf]
    %v350 = vld [vmem:[%s3 + $0x1c] sm:$0xf]
    %v351 = vld [vmem:[%s3 + $0x20] sm:$0xf]
    %v352 = vld [vmem:[%s3 + $0x24] sm:$0xf]
    %v353 = vld [vmem:[%s3 + $0x28] sm:$0xf]
    %v354 = vld [vmem:[%s3 + $0x2c] sm:$0xf]
    %v355 = vld [vmem:[%s3 + $0x30] sm:$0xf]
    %v356 = vld [vmem:[%s3 + $0x34] sm:$0xf]
    %v357 = vld [vmem:[%s3 + $0x38] sm:$0xf]
    %v358 = vld [vmem:[%s3 + $0x3c] sm:$0xf]
    %v359 = vld [vmem:[%s3 + $0x40] sm:$0xf]
    %v360 = vld [vmem:[%s3 + $0x44] sm:$0xf]
    %v361 = vld [vmem:[%s3 + $0x48] sm:$0xf]
    %v362 = vld [vmem:[%s3 + $0x4c] sm:$0xf]
    %v363 = vld [vmem:[%s3 + $0x50] sm:$0xf]
    %v364 = vld [vmem:[%s3 + $0x54] sm:$0xf]
    %v365 = vld [vmem:[%s3 + $0x58] sm:$0xf]
    %v366 = vld [vmem:[%s3 + $0x5c] sm:$0xf]
    %v367 = vld [vmem:[%s3 + $0x60] sm:$0xf]
    %v368 = vld [vmem:[%s3 + $0x64] sm:$0xf]
    %v369 = vld [vmem:[%s3 + $0x68] sm:$0xf]
    %v370 = vld [vmem:[%s3 + $0x6c] sm:$0xf]
    %v371 = vld [vmem:[%s3 + $0x70] sm:$0xf]
    %v372 = vld [vmem:[%s3 + $0x74] sm:$0xf]
    %v373 = vld [vmem:[%s3 + $0x78] sm:$0xf]
    %v374 = vld [vmem:[%s3 + $0x7c] sm:$0xf]
    %v375 = vld [vmem:[%s3 + $0x80] sm:$0xf]
    %v376 = vld [vmem:[%s3 + $0x84] sm:$0xf]
    %v377 = vld [vmem:[%s3 + $0x88] sm:$0xf]
    %v378 = vld [vmem:[%s3 + $0x8c] sm:$0xf]
    %v379 = vld [vmem:[%s3 + $0x90] sm:$0xf]
    %v380 = vld [vmem:[%s3 + $0x94] sm:$0xf]
    %v381 = vld [vmem:[%s3 + $0x98] sm:$0xf]
    %v382 = vld [vmem:[%s3 + $0x9c] sm:$0xf]
    %v383 = vld [vmem:[%s3 + $0xa0] sm:$0xf]
    %v384 = vld [vmem:[%s3 + $0xa4] sm:$0xf]
    %v385 = vld [vmem:[%s3 + $0xa8] sm:$0xf]
    %v386 = vld [vmem:[%s3 + $0xac] sm:$0xf]
    %v387 = vld [vmem:[%s3 + $0xb0] sm:$0xf]
    %v388 = vld [vmem:[%s3 + $0xb4] sm:$0xf]
    %v389 = vld [vmem:[%s3 + $0xb8] sm:$0xf]
    %v390 = vld [vmem:[%s3 + $0xbc] sm:$0xf]
    %v391 = vld [vmem:[%s3 + $0xc0] sm:$0xf]
    %v392 = vld [vmem:[%s3 + $0xc4] sm:$0xf]
    %v393 = vld [vmem:[%s3 + $0xc8] sm:$0xf]
    %v394 = vld [vmem:[%s3 + $0xcc] sm:$0xf]
    %v395 = vld [vmem:[%s3 + $0xd0] sm:$0xf]
    %v396 = vld [vmem:[%s3 + $0xd4] sm:$0xf]
    %v397 = vld [vmem:[%s3 + $0xd8] sm:$0xf]
    %v398 = vld [vmem:[%s3 + $0xdc] sm:$0xf]
    %v399 = vld [vmem:[%s3 + $0xe0] sm:$0xf]
    %v400 = vld [vmem:[%s3 + $0xe4] sm:$0xf]
    %v401 = vld [vmem:[%s3 + $0xe8] sm:$0xf]
    %v402 = vld [vmem:[%s3 + $0xec] sm:$0xf]
    %v403 = vld [vmem:[%s3 + $0xf0] sm:$0xf]
    %v404 = vld [vmem:[%s3 + $0xf4] sm:$0xf]
    %v405 = vld [vmem:[%s3 + $0xf8] sm:$0xf]
    %v406 = vld [vmem:[%s3 + $0xfc] sm:$0xf]
    %v407 = vld [vmem:[%s4] sm:$0x1]
    %v409 = vlaneseq
    %v410 = vshrl.u32 %v409, 7
    %v411 = vsub.s32 0, %v410
    %v412 = vrot.slane %v407, %v411
    %v478 = vunpack.c.l.b16 %v343
    %v479 = vunpack.c.l.b16 %v344
    %v480 = vunpack.c.l.b16 %v345
    %v481 = vunpack.c.l.b16 %v346
    %v482 = vunpack.c.l.b16 %v347
    %v483 = vunpack.c.l.b16 %v348
    %v484 = vunpack.c.l.b16 %v349
    %v485 = vunpack.c.l.b16 %v350
    %v486 = vunpack.c.l.b16 %v351
    %v487 = vunpack.c.l.b16 %v352
    %v488 = vunpack.c.l.b16 %v353
    %v489 = vunpack.c.l.b16 %v354
    %v490 = vunpack.c.l.b16 %v355
    %v491 = vunpack.c.l.b16 %v356
    %v492 = vunpack.c.l.b16 %v357
    %v493 = vunpack.c.l.b16 %v358
    %v494 = vunpack.c.l.b16 %v359
    %v495 = vunpack.c.l.b16 %v360
    %v496 = vunpack.c.l.b16 %v361
    %v497 = vunpack.c.l.b16 %v362
    %v498 = vunpack.c.l.b16 %v363
    %v499 = vunpack.c.l.b16 %v364
    %v500 = vunpack.c.l.b16 %v365
    %v501 = vunpack.c.l.b16 %v366
    %v502 = vunpack.c.l.b16 %v367
    %v503 = vunpack.c.l.b16 %v368
    %v504 = vunpack.c.l.b16 %v369
    %v505 = vunpack.c.l.b16 %v370
    %v506 = vunpack.c.l.b16 %v371
    %v507 = vunpack.c.l.b16 %v372
    %v508 = vunpack.c.l.b16 %v373
    %v509 = vunpack.c.l.b16 %v374
    %v510 = vunpack.c.l.b16 %v375
    %v511 = vunpack.c.l.b16 %v376
    %v512 = vunpack.c.l.b16 %v377
    %v513 = vunpack.c.l.b16 %v378
    %v514 = vunpack.c.l.b16 %v379
    %v515 = vunpack.c.l.b16 %v380
    %v516 = vunpack.c.l.b16 %v381
    %v517 = vunpack.c.l.b16 %v382
    %v518 = vunpack.c.l.b16 %v383
    %v519 = vunpack.c.l.b16 %v384
    %v520 = vunpack.c.l.b16 %v385
    %v521 = vunpack.c.l.b16 %v386
    %v522 = vunpack.c.l.b16 %v387
    %v523 = vunpack.c.l.b16 %v388
    %v524 = vunpack.c.l.b16 %v389
    %v525 = vunpack.c.l.b16 %v390
    %v526 = vunpack.c.l.b16 %v391
    %v527 = vunpack.c.l.b16 %v392
    %v528 = vunpack.c.l.b16 %v393
    %v529 = vunpack.c.l.b16 %v394
    %v530 = vunpack.c.l.b16 %v395
    %v531 = vunpack.c.l.b16 %v396
    %v532 = vunpack.c.l.b16 %v397
    %v533 = vunpack.c.l.b16 %v398
    %v534 = vunpack.c.l.b16 %v399
    %v535 = vunpack.c.l.b16 %v400
    %v536 = vunpack.c.l.b16 %v401
    %v537 = vunpack.c.l.b16 %v402
    %v538 = vunpack.c.l.b16 %v403
    %v539 = vunpack.c.l.b16 %v404
    %v540 = vunpack.c.l.b16 %v405
    %v541 = vunpack.c.l.b16 %v406
    %v542 = vpack.c.b16 %v479, %v478
    %v543 = vpack.c.b16 %v481, %v480
    %v544 = vpack.c.b16 %v483, %v482
    %v545 = vpack.c.b16 %v485, %v484
    %v546 = vpack.c.b16 %v487, %v486
    %v547 = vpack.c.b16 %v489, %v488
    %v548 = vpack.c.b16 %v491, %v490
    %v549 = vpack.c.b16 %v493, %v492
    %v550 = vpack.c.b16 %v495, %v494
    %v551 = vpack.c.b16 %v497, %v496
    %v552 = vpack.c.b16 %v499, %v498
    %v553 = vpack.c.b16 %v501, %v500
    %v554 = vpack.c.b16 %v503, %v502
    %v555 = vpack.c.b16 %v505, %v504
    %v556 = vpack.c.b16 %v507, %v506
    %v557 = vpack.c.b16 %v509, %v508
    %v558 = vpack.c.b16 %v511, %v510
    %v559 = vpack.c.b16 %v513, %v512
    %v560 = vpack.c.b16 %v515, %v514
    %v561 = vpack.c.b16 %v517, %v516
    %v562 = vpack.c.b16 %v519, %v518
    %v563 = vpack.c.b16 %v521, %v520
    %v564 = vpack.c.b16 %v523, %v522
    %v565 = vpack.c.b16 %v525, %v524
    %v566 = vpack.c.b16 %v527, %v526
    %v567 = vpack.c.b16 %v529, %v528
    %v568 = vpack.c.b16 %v531, %v530
    %v569 = vpack.c.b16 %v533, %v532
    %v570 = vpack.c.b16 %v535, %v534
    %v571 = vpack.c.b16 %v537, %v536
    %v572 = vpack.c.b16 %v539, %v538
    %v573 = vpack.c.b16 %v541, %v540
    %606 = vmatprep.subr.bf16.mxu0 0
    %607 = vmatpush1.bf16.msra.mxu0 %v542
    %608 = vmatprep.subr.bf16.mxu0 0
    %609 = vmatpush1.bf16.msra.mxu0 %v543
    %610 = vmatprep.subr.bf16.mxu0 0
    %611 = vmatpush1.bf16.msra.mxu0 %v544
    %612 = vmatprep.subr.bf16.mxu0 0
    %613 = vmatpush1.bf16.msra.mxu0 %v545
    %614 = vmatprep.subr.bf16.mxu0 0
    %615 = vmatpush1.bf16.msra.mxu0 %v546
    %616 = vmatprep.subr.bf16.mxu0 0
    %617 = vmatpush1.bf16.msra.mxu0 %v547
    %618 = vmatprep.subr.bf16.mxu0 0
    %619 = vmatpush1.bf16.msra.mxu0 %v548
    %620 = vmatprep.subr.bf16.mxu0 0
    %621 = vmatpush1.bf16.msra.mxu0 %v549
    %622 = vmatprep.subr.bf16.mxu0 0
    %623 = vmatpush1.bf16.msra.mxu0 %v550
    %624 = vmatprep.subr.bf16.mxu0 0
    %625 = vmatpush1.bf16.msra.mxu0 %v551
    %626 = vmatprep.subr.bf16.mxu0 0
    %627 = vmatpush1.bf16.msra.mxu0 %v552
    %628 = vmatprep.subr.bf16.mxu0 0
    %629 = vmatpush1.bf16.msra.mxu0 %v553
    %630 = vmatprep.subr.bf16.mxu0 0
    %631 = vmatpush1.bf16.msra.mxu0 %v554
    %632 = vmatprep.subr.bf16.mxu0 0
    %633 = vmatpush1.bf16.msra.mxu0 %v555
    %634 = vmatprep.subr.bf16.mxu0 0
    %635 = vmatpush1.bf16.msra.mxu0 %v556
    %636 = vmatprep.subr.bf16.mxu0 0
    %637 = vmatpush1.bf16.msra.mxu0 %v557
    %638 = vmatprep.mubr.bf16.mxu0 %v340
    %639 = vmatmul.mubr.bf16.gmra.mrb[0].mxu0 %v339
    %v640 = vpop.f32.mrb[0].mxu0
    %v641 = vadd.f32 %v412, %v640
    %v642 = vpop.f32.mrb[0].mxu0
    %v643 = vpop.f32.mrb[0].mxu0
    %v644 = vpop.f32.mrb[0].mxu0
    %645 = vdwg.mxu0
    %646 = vmatprep.subr.bf16.mxu0 0
    %647 = vmatpush1.bf16.msra.mxu0 %v558
    %648 = vmatprep.subr.bf16.mxu0 0
    %649 = vmatpush1.bf16.msra.mxu0 %v559
    %650 = vmatprep.subr.bf16.mxu0 0
    %651 = vmatpush1.bf16.msra.mxu0 %v560
    %652 = vmatprep.subr.bf16.mxu0 0
    %653 = vmatpush1.bf16.msra.mxu0 %v561
    %654 = vmatprep.subr.bf16.mxu0 0
    %655 = vmatpush1.bf16.msra.mxu0 %v562
    %656 = vmatprep.subr.bf16.mxu0 0
    %657 = vmatpush1.bf16.msra.mxu0 %v563
    %658 = vmatprep.subr.bf16.mxu0 0
    %659 = vmatpush1.bf16.msra.mxu0 %v564
    %660 = vmatprep.subr.bf16.mxu0 0
    %661 = vmatpush1.bf16.msra.mxu0 %v565
    %662 = vmatprep.subr.bf16.mxu0 0
    %663 = vmatpush1.bf16.msra.mxu0 %v566
    %664 = vmatprep.subr.bf16.mxu0 0
    %665 = vmatpush1.bf16.msra.mxu0 %v567
    %666 = vmatprep.subr.bf16.mxu0 0
    %667 = vmatpush1.bf16.msra.mxu0 %v568
    %668 = vmatprep.subr.bf16.mxu0 0
    %669 = vmatpush1.bf16.msra.mxu0 %v569
    %670 = vmatprep.subr.bf16.mxu0 0
    %671 = vmatpush1.bf16.msra.mxu0 %v570
    %672 = vmatprep.subr.bf16.mxu0 0
    %673 = vmatpush1.bf16.msra.mxu0 %v571
    %674 = vmatprep.subr.bf16.mxu0 0
    %675 = vmatpush1.bf16.msra.mxu0 %v572
    %676 = vmatprep.subr.bf16.mxu0 0
    %677 = vmatpush1.bf16.msra.mxu0 %v573
    %678 = vmatprep.mubr.bf16.mxu0 %v342
    %679 = vmatmul.mubr.bf16.gmra.mrb[0].mxu0 %v341
    %v680 = vpop.f32.mrb[0].mxu0
    %v681 = vadd.f32 %v641, %v680
    %v682 = vpop.f32.mrb[0].mxu0
    %v683 = vpop.f32.mrb[0].mxu0
    %v684 = vpop.f32.mrb[0].mxu0
    %685 = vdwg.mxu0
    %686 = vst [vmem:[#allocation2] sm:$0xff] %v681
    %v687 = vpack.c.bf16 %v681, %v681
    %v688 = vld [vmem:[%s5] sm:$0xff]
    %v689 = vld [vmem:[%s5 + $0x8] sm:$0xff]
    %v690 = vld [vmem:[%s5 + $0x10] sm:$0xff]
    %v691 = vld [vmem:[%s5 + $0x18] sm:$0xff]
    %v692 = vld [vmem:[%s5 + $0x20] sm:$0xff]
    %v693 = vld [vmem:[%s5 + $0x28] sm:$0xff]
    %v694 = vld [vmem:[%s5 + $0x30] sm:$0xff]
    %v695 = vld [vmem:[%s5 + $0x38] sm:$0xff]
    %v696 = vld [vmem:[%s5 + $0x40] sm:$0xff]
    %v697 = vld [vmem:[%s5 + $0x48] sm:$0xff]
    %v698 = vld [vmem:[%s5 + $0x50] sm:$0xff]
    %v699 = vld [vmem:[%s5 + $0x58] sm:$0xff]
    %v700 = vld [vmem:[%s5 + $0x60] sm:$0xff]
    %v701 = vld [vmem:[%s5 + $0x68] sm:$0xff]
    %v702 = vld [vmem:[%s5 + $0x70] sm:$0xff]
    %v703 = vld [vmem:[%s5 + $0x78] sm:$0xff]
    %v704 = vld [vmem:[%s5 + $0x80] sm:$0xff]
    %v705 = vld [vmem:[%s5 + $0x88] sm:$0xff]
    %v706 = vld [vmem:[%s5 + $0x90] sm:$0xff]
    %v707 = vld [vmem:[%s5 + $0x98] sm:$0xff]
    %v708 = vld [vmem:[%s5 + $0xa0] sm:$0xff]
    %v709 = vld [vmem:[%s5 + $0xa8] sm:$0xff]
    %v710 = vld [vmem:[%s5 + $0xb0] sm:$0xff]
    %v711 = vld [vmem:[%s5 + $0xb8] sm:$0xff]
    %v712 = vld [vmem:[%s5 + $0xc0] sm:$0xff]
    %v713 = vld [vmem:[%s5 + $0xc8] sm:$0xff]
    %v714 = vld [vmem:[%s5 + $0xd0] sm:$0xff]
    %v715 = vld [vmem:[%s5 + $0xd8] sm:$0xff]
    %v716 = vld [vmem:[%s5 + $0xe0] sm:$0xff]
    %v717 = vld [vmem:[%s5 + $0xe8] sm:$0xff]
    %v718 = vld [vmem:[%s5 + $0xf0] sm:$0xff]
    %v719 = vld [vmem:[%s5 + $0xf8] sm:$0xff]
    %v720 = vld [vmem:[%s6] sm:$0xf]
    %v722 = vlaneseq
    %v723 = vshrl.u32 %v722, 7
    %v724 = vsub.s32 0, %v723
    %v725 = vrot.slane %v720, %v724
    %v726 = vlaneseq
    %v727 = vshrl.u32 %v726, 7
    %v728 = vsub.s32 1, %v727
    %v729 = vrot.slane %v720, %v728
    %v730 = vlaneseq
    %v731 = vshrl.u32 %v730, 7
    %v732 = vsub.s32 2, %v731
    %v733 = vrot.slane %v720, %v732
    %v734 = vlaneseq
    %v735 = vshrl.u32 %v734, 7
    %v736 = vsub.s32 3, %v735
    %v737 = vrot.slane %v720, %v736
    %v774 = vunpack.c.l.b16 %v688
    %v775 = vunpack.c.h.b16 %v688
    %v776 = vunpack.c.l.b16 %v689
    %v777 = vunpack.c.h.b16 %v689
    %v778 = vunpack.c.l.b16 %v690
    %v779 = vunpack.c.h.b16 %v690
    %v780 = vunpack.c.l.b16 %v691
    %v781 = vunpack.c.h.b16 %v691
    %v782 = vunpack.c.l.b16 %v692
    %v783 = vunpack.c.h.b16 %v692
    %v784 = vunpack.c.l.b16 %v693
    %v785 = vunpack.c.h.b16 %v693
    %v786 = vunpack.c.l.b16 %v694
    %v787 = vunpack.c.h.b16 %v694
    %v788 = vunpack.c.l.b16 %v695
    %v789 = vunpack.c.h.b16 %v695
    %v790 = vunpack.c.l.b16 %v696
    %v791 = vunpack.c.h.b16 %v696
    %v792 = vunpack.c.l.b16 %v697
    %v793 = vunpack.c.h.b16 %v697
    %v794 = vunpack.c.l.b16 %v698
    %v795 = vunpack.c.h.b16 %v698
    %v796 = vunpack.c.l.b16 %v699
    %v797 = vunpack.c.h.b16 %v699
    %v798 = vunpack.c.l.b16 %v700
    %v799 = vunpack.c.h.b16 %v700
    %v800 = vunpack.c.l.b16 %v701
    %v801 = vunpack.c.h.b16 %v701
    %v802 = vunpack.c.l.b16 %v702
    %v803 = vunpack.c.h.b16 %v702
    %v804 = vunpack.c.l.b16 %v703
    %v805 = vunpack.c.h.b16 %v703
    %v806 = vunpack.c.l.b16 %v704
    %v807 = vunpack.c.h.b16 %v704
    %v808 = vunpack.c.l.b16 %v705
    %v809 = vunpack.c.h.b16 %v705
    %v810 = vunpack.c.l.b16 %v706
    %v811 = vunpack.c.h.b16 %v706
    %v812 = vunpack.c.l.b16 %v707
    %v813 = vunpack.c.h.b16 %v707
    %v814 = vunpack.c.l.b16 %v708
    %v815 = vunpack.c.h.b16 %v708
    %v816 = vunpack.c.l.b16 %v709
    %v817 = vunpack.c.h.b16 %v709
    %v818 = vunpack.c.l.b16 %v710
    %v819 = vunpack.c.h.b16 %v710
    %v820 = vunpack.c.l.b16 %v711
    %v821 = vunpack.c.h.b16 %v711
    %v822 = vunpack.c.l.b16 %v712
    %v823 = vunpack.c.h.b16 %v712
    %v824 = vunpack.c.l.b16 %v713
    %v825 = vunpack.c.h.b16 %v713
    %v826 = vunpack.c.l.b16 %v714
    %v827 = vunpack.c.h.b16 %v714
    %v828 = vunpack.c.l.b16 %v715
    %v829 = vunpack.c.h.b16 %v715
    %v830 = vunpack.c.l.b16 %v716
    %v831 = vunpack.c.h.b16 %v716
    %v832 = vunpack.c.l.b16 %v717
    %v833 = vunpack.c.h.b16 %v717
    %v834 = vunpack.c.l.b16 %v718
    %v835 = vunpack.c.h.b16 %v718
    %v836 = vunpack.c.l.b16 %v719
    %v837 = vunpack.c.h.b16 %v719
    %v838 = vpack.c.b16 %v778, %v774
    %v839 = vpack.c.b16 %v779, %v775
    %v840 = vpack.c.b16 %v780, %v776
    %v841 = vpack.c.b16 %v781, %v777
    %v842 = vpack.c.b16 %v786, %v782
    %v843 = vpack.c.b16 %v787, %v783
    %v844 = vpack.c.b16 %v788, %v784
    %v845 = vpack.c.b16 %v789, %v785
    %v846 = vpack.c.b16 %v794, %v790
    %v847 = vpack.c.b16 %v795, %v791
    %v848 = vpack.c.b16 %v796, %v792
    %v849 = vpack.c.b16 %v797, %v793
    %v850 = vpack.c.b16 %v802, %v798
    %v851 = vpack.c.b16 %v803, %v799
    %v852 = vpack.c.b16 %v804, %v800
    %v853 = vpack.c.b16 %v805, %v801
    %v854 = vpack.c.b16 %v810, %v806
    %v855 = vpack.c.b16 %v811, %v807
    %v856 = vpack.c.b16 %v812, %v808
    %v857 = vpack.c.b16 %v813, %v809
    %v858 = vpack.c.b16 %v818, %v814
    %v859 = vpack.c.b16 %v819, %v815
    %v860 = vpack.c.b16 %v820, %v816
    %v861 = vpack.c.b16 %v821, %v817
    %v862 = vpack.c.b16 %v826, %v822
    %v863 = vpack.c.b16 %v827, %v823
    %v864 = vpack.c.b16 %v828, %v824
    %v865 = vpack.c.b16 %v829, %v825
    %v866 = vpack.c.b16 %v834, %v830
    %v867 = vpack.c.b16 %v835, %v831
    %v868 = vpack.c.b16 %v836, %v832
    %v869 = vpack.c.b16 %v837, %v833
    %902 = vmatprep.subr.bf16.mxu0 %v839
    %903 = vmatpush1.bf16.msra.mxu0 %v838
    %904 = vmatprep.subr.bf16.mxu0 %v843
    %905 = vmatpush1.bf16.msra.mxu0 %v842
    %906 = vmatprep.subr.bf16.mxu0 %v847
    %907 = vmatpush1.bf16.msra.mxu0 %v846
    %908 = vmatprep.subr.bf16.mxu0 %v851
    %909 = vmatpush1.bf16.msra.mxu0 %v850
    %910 = vmatprep.subr.bf16.mxu0 %v855
    %911 = vmatpush1.bf16.msra.mxu0 %v854
    %912 = vmatprep.subr.bf16.mxu0 %v859
    %913 = vmatpush1.bf16.msra.mxu0 %v858
    %914 = vmatprep.subr.bf16.mxu0 %v863
    %915 = vmatpush1.bf16.msra.mxu0 %v862
    %916 = vmatprep.subr.bf16.mxu0 %v867
    %917 = vmatpush1.bf16.msra.mxu0 %v866
    %918 = vmatprep.subr.bf16.mxu0 0
    %919 = vmatpush1.bf16.msra.mxu0 0
    %920 = vmatprep.subr.bf16.mxu0 0
    %921 = vmatpush1.bf16.msra.mxu0 0
    %922 = vmatprep.subr.bf16.mxu0 0
    %923 = vmatpush1.bf16.msra.mxu0 0
    %924 = vmatprep.subr.bf16.mxu0 0
    %925 = vmatpush1.bf16.msra.mxu0 0
    %926 = vmatprep.subr.bf16.mxu0 0
    %927 = vmatpush1.bf16.msra.mxu0 0
    %928 = vmatprep.subr.bf16.mxu0 0
    %929 = vmatpush1.bf16.msra.mxu0 0
    %930 = vmatprep.subr.bf16.mxu0 0
    %931 = vmatpush1.bf16.msra.mxu0 0
    %932 = vmatprep.subr.bf16.mxu0 0
    %933 = vmatpush1.bf16.msra.mxu0 0
    %934 = vmatprep.mubr.bf16.mxu0 0
    %935 = vmatmul.mubr.bf16.gmra.mrb[0].mxu0 %v687
    %v936 = vpop.f32.mrb[0].mxu0
    %v937 = vadd.f32 %v725, %v936
    %v938 = vpop.f32.mrb[0].mxu0
    %v939 = vadd.f32 %v729, %v938
    %v940 = vpop.f32.mrb[0].mxu0
    %v941 = vpop.f32.mrb[0].mxu0
    %942 = vdwg.mxu0
    %943 = vmatprep.subr.bf16.mxu0 %v841
    %944 = vmatpush1.bf16.msra.mxu0 %v840
    %945 = vmatprep.subr.bf16.mxu0 %v845
    %946 = vmatpush1.bf16.msra.mxu0 %v844
    %947 = vmatprep.subr.bf16.mxu0 %v849
    %948 = vmatpush1.bf16.msra.mxu0 %v848
    %949 = vmatprep.subr.bf16.mxu0 %v853
    %950 = vmatpush1.bf16.msra.mxu0 %v852
    %951 = vmatprep.subr.bf16.mxu0 %v857
    %952 = vmatpush1.bf16.msra.mxu0 %v856
    %953 = vmatprep.subr.bf16.mxu0 %v861
    %954 = vmatpush1.bf16.msra.mxu0 %v860
    %955 = vmatprep.subr.bf16.mxu0 %v865
    %956 = vmatpush1.bf16.msra.mxu0 %v864
    %957 = vmatprep.subr.bf16.mxu0 %v869
    %958 = vmatpush1.bf16.msra.mxu0 %v868
    %959 = vmatprep.subr.bf16.mxu0 0
    %960 = vmatpush1.bf16.msra.mxu0 0
    %961 = vmatprep.subr.bf16.mxu0 0
    %962 = vmatpush1.bf16.msra.mxu0 0
    %963 = vmatprep.subr.bf16.mxu0 0
    %964 = vmatpush1.bf16.msra.mxu0 0
    %965 = vmatprep.subr.bf16.mxu0 0
    %966 = vmatpush1.bf16.msra.mxu0 0
    %967 = vmatprep.subr.bf16.mxu0 0
    %968 = vmatpush1.bf16.msra.mxu0 0
    %969 = vmatprep.subr.bf16.mxu0 0
    %970 = vmatpush1.bf16.msra.mxu0 0
    %971 = vmatprep.subr.bf16.mxu0 0
    %972 = vmatpush1.bf16.msra.mxu0 0
    %973 = vmatprep.subr.bf16.mxu0 0
    %974 = vmatpush1.bf16.msra.mxu0 0
    %975 = vmatprep.mubr.bf16.mxu0 0
    %976 = vmatmul.mubr.bf16.gmra.mrb[0].mxu0 %v687
    %v977 = vpop.f32.mrb[0].mxu0
    %v978 = vadd.f32 %v733, %v977
    %v979 = vpop.f32.mrb[0].mxu0
    %v980 = vadd.f32 %v737, %v979
    %v981 = vpop.f32.mrb[0].mxu0
    %v982 = vpop.f32.mrb[0].mxu0
    %983 = vdwg.mxu0
    %v984 = vmax.f32 %v937, 0.0
    %v985 = vmax.f32 %v939, 0.0
    %v986 = vmax.f32 %v978, 0.0
    %v987 = vmax.f32 %v980, 0.0
    %v988 = vpack.c.bf16 %v984, %v984
    %v989 = vpack.c.bf16 %v985, %v985
    %v990 = vpack.c.bf16 %v986, %v986
    %v991 = vpack.c.bf16 %v987, %v987
    %v992 = vld [vmem:[%s7] sm:$0xf]
    %v993 = vld [vmem:[%s7 + $0x4] sm:$0xf]
    %v994 = vld [vmem:[%s7 + $0x8] sm:$0xf]
    %v995 = vld [vmem:[%s7 + $0xc] sm:$0xf]
    %v996 = vld [vmem:[%s7 + $0x10] sm:$0xf]
    %v997 = vld [vmem:[%s7 + $0x14] sm:$0xf]
    %v998 = vld [vmem:[%s7 + $0x18] sm:$0xf]
    %v999 = vld [vmem:[%s7 + $0x1c] sm:$0xf]
    %v1000 = vld [vmem:[%s7 + $0x20] sm:$0xf]
    %v1001 = vld [vmem:[%s7 + $0x24] sm:$0xf]
    %v1002 = vld [vmem:[%s7 + $0x28] sm:$0xf]
    %v1003 = vld [vmem:[%s7 + $0x2c] sm:$0xf]
    %v1004 = vld [vmem:[%s7 + $0x30] sm:$0xf]
    %v1005 = vld [vmem:[%s7 + $0x34] sm:$0xf]
    %v1006 = vld [vmem:[%s7 + $0x38] sm:$0xf]
    %v1007 = vld [vmem:[%s7 + $0x3c] sm:$0xf]
    %v1008 = vld [vmem:[%s7 + $0x40] sm:$0xf]
    %v1009 = vld [vmem:[%s7 + $0x44] sm:$0xf]
    %v1010 = vld [vmem:[%s7 + $0x48] sm:$0xf]
    %v1011 = vld [vmem:[%s7 + $0x4c] sm:$0xf]
    %v1012 = vld [vmem:[%s7 + $0x50] sm:$0xf]
    %v1013 = vld [vmem:[%s7 + $0x54] sm:$0xf]
    %v1014 = vld [vmem:[%s7 + $0x58] sm:$0xf]
    %v1015 = vld [vmem:[%s7 + $0x5c] sm:$0xf]
    %v1016 = vld [vmem:[%s7 + $0x60] sm:$0xf]
    %v1017 = vld [vmem:[%s7 + $0x64] sm:$0xf]
    %v1018 = vld [vmem:[%s7 + $0x68] sm:$0xf]
    %v1019 = vld [vmem:[%s7 + $0x6c] sm:$0xf]
    %v1020 = vld [vmem:[%s7 + $0x70] sm:$0xf]
    %v1021 = vld [vmem:[%s7 + $0x74] sm:$0xf]
    %v1022 = vld [vmem:[%s7 + $0x78] sm:$0xf]
    %v1023 = vld [vmem:[%s7 + $0x7c] sm:$0xf]
    %v1024 = vld [vmem:[%s7 + $0x80] sm:$0xf]
    %v1025 = vld [vmem:[%s7 + $0x84] sm:$0xf]
    %v1026 = vld [vmem:[%s7 + $0x88] sm:$0xf]
    %v1027 = vld [vmem:[%s7 + $0x8c] sm:$0xf]
    %v1028 = vld [vmem:[%s7 + $0x90] sm:$0xf]
    %v1029 = vld [vmem:[%s7 + $0x94] sm:$0xf]
    %v1030 = vld [vmem:[%s7 + $0x98] sm:$0xf]
    %v1031 = vld [vmem:[%s7 + $0x9c] sm:$0xf]
    %v1032 = vld [vmem:[%s7 + $0xa0] sm:$0xf]
    %v1033 = vld [vmem:[%s7 + $0xa4] sm:$0xf]
    %v1034 = vld [vmem:[%s7 + $0xa8] sm:$0xf]
    %v1035 = vld [vmem:[%s7 + $0xac] sm:$0xf]
    %v1036 = vld [vmem:[%s7 + $0xb0] sm:$0xf]
    %v1037 = vld [vmem:[%s7 + $0xb4] sm:$0xf]
    %v1038 = vld [vmem:[%s7 + $0xb8] sm:$0xf]
    %v1039 = vld [vmem:[%s7 + $0xbc] sm:$0xf]
    %v1040 = vld [vmem:[%s7 + $0xc0] sm:$0xf]
    %v1041 = vld [vmem:[%s7 + $0xc4] sm:$0xf]
    %v1042 = vld [vmem:[%s7 + $0xc8] sm:$0xf]
    %v1043 = vld [vmem:[%s7 + $0xcc] sm:$0xf]
    %v1044 = vld [vmem:[%s7 + $0xd0] sm:$0xf]
    %v1045 = vld [vmem:[%s7 + $0xd4] sm:$0xf]
    %v1046 = vld [vmem:[%s7 + $0xd8] sm:$0xf]
    %v1047 = vld [vmem:[%s7 + $0xdc] sm:$0xf]
    %v1048 = vld [vmem:[%s7 + $0xe0] sm:$0xf]
    %v1049 = vld [vmem:[%s7 + $0xe4] sm:$0xf]
    %v1050 = vld [vmem:[%s7 + $0xe8] sm:$0xf]
    %v1051 = vld [vmem:[%s7 + $0xec] sm:$0xf]
    %v1052 = vld [vmem:[%s7 + $0xf0] sm:$0xf]
    %v1053 = vld [vmem:[%s7 + $0xf4] sm:$0xf]
    %v1054 = vld [vmem:[%s7 + $0xf8] sm:$0xf]
    %v1055 = vld [vmem:[%s7 + $0xfc] sm:$0xf]
    %v1056 = vld [vmem:[%s8] sm:$0x1]
    %v1058 = vlaneseq
    %v1059 = vshrl.u32 %v1058, 7
    %v1060 = vsub.s32 0, %v1059
    %v1061 = vrot.slane %v1056, %v1060
    %v1127 = vunpack.c.l.b16 %v992
    %v1128 = vunpack.c.l.b16 %v993
    %v1129 = vunpack.c.l.b16 %v994
    %v1130 = vunpack.c.l.b16 %v995
    %v1131 = vunpack.c.l.b16 %v996
    %v1132 = vunpack.c.l.b16 %v997
    %v1133 = vunpack.c.l.b16 %v998
    %v1134 = vunpack.c.l.b16 %v999
    %v1135 = vunpack.c.l.b16 %v1000
    %v1136 = vunpack.c.l.b16 %v1001
    %v1137 = vunpack.c.l.b16 %v1002
    %v1138 = vunpack.c.l.b16 %v1003
    %v1139 = vunpack.c.l.b16 %v1004
    %v1140 = vunpack.c.l.b16 %v1005
    %v1141 = vunpack.c.l.b16 %v1006
    %v1142 = vunpack.c.l.b16 %v1007
    %v1143 = vunpack.c.l.b16 %v1008
    %v1144 = vunpack.c.l.b16 %v1009
    %v1145 = vunpack.c.l.b16 %v1010
    %v1146 = vunpack.c.l.b16 %v1011
    %v1147 = vunpack.c.l.b16 %v1012
    %v1148 = vunpack.c.l.b16 %v1013
    %v1149 = vunpack.c.l.b16 %v1014
    %v1150 = vunpack.c.l.b16 %v1015
    %v1151 = vunpack.c.l.b16 %v1016
    %v1152 = vunpack.c.l.b16 %v1017
    %v1153 = vunpack.c.l.b16 %v1018
    %v1154 = vunpack.c.l.b16 %v1019
    %v1155 = vunpack.c.l.b16 %v1020
    %v1156 = vunpack.c.l.b16 %v1021
    %v1157 = vunpack.c.l.b16 %v1022
    %v1158 = vunpack.c.l.b16 %v1023
    %v1159 = vunpack.c.l.b16 %v1024
    %v1160 = vunpack.c.l.b16 %v1025
    %v1161 = vunpack.c.l.b16 %v1026
    %v1162 = vunpack.c.l.b16 %v1027
    %v1163 = vunpack.c.l.b16 %v1028
    %v1164 = vunpack.c.l.b16 %v1029
    %v1165 = vunpack.c.l.b16 %v1030
    %v1166 = vunpack.c.l.b16 %v1031
    %v1167 = vunpack.c.l.b16 %v1032
    %v1168 = vunpack.c.l.b16 %v1033
    %v1169 = vunpack.c.l.b16 %v1034
    %v1170 = vunpack.c.l.b16 %v1035
    %v1171 = vunpack.c.l.b16 %v1036
    %v1172 = vunpack.c.l.b16 %v1037
    %v1173 = vunpack.c.l.b16 %v1038
    %v1174 = vunpack.c.l.b16 %v1039
    %v1175 = vunpack.c.l.b16 %v1040
    %v1176 = vunpack.c.l.b16 %v1041
    %v1177 = vunpack.c.l.b16 %v1042
    %v1178 = vunpack.c.l.b16 %v1043
    %v1179 = vunpack.c.l.b16 %v1044
    %v1180 = vunpack.c.l.b16 %v1045
    %v1181 = vunpack.c.l.b16 %v1046
    %v1182 = vunpack.c.l.b16 %v1047
    %v1183 = vunpack.c.l.b16 %v1048
    %v1184 = vunpack.c.l.b16 %v1049
    %v1185 = vunpack.c.l.b16 %v1050
    %v1186 = vunpack.c.l.b16 %v1051
    %v1187 = vunpack.c.l.b16 %v1052
    %v1188 = vunpack.c.l.b16 %v1053
    %v1189 = vunpack.c.l.b16 %v1054
    %v1190 = vunpack.c.l.b16 %v1055
    %v1191 = vpack.c.b16 %v1128, %v1127
    %v1192 = vpack.c.b16 %v1130, %v1129
    %v1193 = vpack.c.b16 %v1132, %v1131
    %v1194 = vpack.c.b16 %v1134, %v1133
    %v1195 = vpack.c.b16 %v1136, %v1135
    %v1196 = vpack.c.b16 %v1138, %v1137
    %v1197 = vpack.c.b16 %v1140, %v1139
    %v1198 = vpack.c.b16 %v1142, %v1141
    %v1199 = vpack.c.b16 %v1144, %v1143
    %v1200 = vpack.c.b16 %v1146, %v1145
    %v1201 = vpack.c.b16 %v1148, %v1147
    %v1202 = vpack.c.b16 %v1150, %v1149
    %v1203 = vpack.c.b16 %v1152, %v1151
    %v1204 = vpack.c.b16 %v1154, %v1153
    %v1205 = vpack.c.b16 %v1156, %v1155
    %v1206 = vpack.c.b16 %v1158, %v1157
    %v1207 = vpack.c.b16 %v1160, %v1159
    %v1208 = vpack.c.b16 %v1162, %v1161
    %v1209 = vpack.c.b16 %v1164, %v1163
    %v1210 = vpack.c.b16 %v1166, %v1165
    %v1211 = vpack.c.b16 %v1168, %v1167
    %v1212 = vpack.c.b16 %v1170, %v1169
    %v1213 = vpack.c.b16 %v1172, %v1171
    %v1214 = vpack.c.b16 %v1174, %v1173
    %v1215 = vpack.c.b16 %v1176, %v1175
    %v1216 = vpack.c.b16 %v1178, %v1177
    %v1217 = vpack.c.b16 %v1180, %v1179
    %v1218 = vpack.c.b16 %v1182, %v1181
    %v1219 = vpack.c.b16 %v1184, %v1183
    %v1220 = vpack.c.b16 %v1186, %v1185
    %v1221 = vpack.c.b16 %v1188, %v1187
    %v1222 = vpack.c.b16 %v1190, %v1189
    %1255 = vmatprep.subr.bf16.mxu0 0
    %1256 = vmatpush1.bf16.msra.mxu0 %v1191
    %1257 = vmatprep.subr.bf16.mxu0 0
    %1258 = vmatpush1.bf16.msra.mxu0 %v1192
    %1259 = vmatprep.subr.bf16.mxu0 0
    %1260 = vmatpush1.bf16.msra.mxu0 %v1193
    %1261 = vmatprep.subr.bf16.mxu0 0
    %1262 = vmatpush1.bf16.msra.mxu0 %v1194
    %1263 = vmatprep.subr.bf16.mxu0 0
    %1264 = vmatpush1.bf16.msra.mxu0 %v1195
    %1265 = vmatprep.subr.bf16.mxu0 0
    %1266 = vmatpush1.bf16.msra.mxu0 %v1196
    %1267 = vmatprep.subr.bf16.mxu0 0
    %1268 = vmatpush1.bf16.msra.mxu0 %v1197
    %1269 = vmatprep.subr.bf16.mxu0 0
    %1270 = vmatpush1.bf16.msra.mxu0 %v1198
    %1271 = vmatprep.subr.bf16.mxu0 0
    %1272 = vmatpush1.bf16.msra.mxu0 %v1199
    %1273 = vmatprep.subr.bf16.mxu0 0
    %1274 = vmatpush1.bf16.msra.mxu0 %v1200
    %1275 = vmatprep.subr.bf16.mxu0 0
    %1276 = vmatpush1.bf16.msra.mxu0 %v1201
    %1277 = vmatprep.subr.bf16.mxu0 0
    %1278 = vmatpush1.bf16.msra.mxu0 %v1202
    %1279 = vmatprep.subr.bf16.mxu0 0
    %1280 = vmatpush1.bf16.msra.mxu0 %v1203
    %1281 = vmatprep.subr.bf16.mxu0 0
    %1282 = vmatpush1.bf16.msra.mxu0 %v1204
    %1283 = vmatprep.subr.bf16.mxu0 0
    %1284 = vmatpush1.bf16.msra.mxu0 %v1205
    %1285 = vmatprep.subr.bf16.mxu0 0
    %1286 = vmatpush1.bf16.msra.mxu0 %v1206
    %1287 = vmatprep.mubr.bf16.mxu0 %v989
    %1288 = vmatmul.mubr.bf16.gmra.mrb[0].mxu0 %v988
    %v1289 = vpop.f32.mrb[0].mxu0
    %v1290 = vadd.f32 %v1061, %v1289
    %v1291 = vpop.f32.mrb[0].mxu0
    %v1292 = vpop.f32.mrb[0].mxu0
    %v1293 = vpop.f32.mrb[0].mxu0
    %1294 = vdwg.mxu0
    %1295 = vmatprep.subr.bf16.mxu0 0
    %1296 = vmatpush1.bf16.msra.mxu0 %v1207
    %1297 = vmatprep.subr.bf16.mxu0 0
    %1298 = vmatpush1.bf16.msra.mxu0 %v1208
    %1299 = vmatprep.subr.bf16.mxu0 0
    %1300 = vmatpush1.bf16.msra.mxu0 %v1209
    %1301 = vmatprep.subr.bf16.mxu0 0
    %1302 = vmatpush1.bf16.msra.mxu0 %v1210
    %1303 = vmatprep.subr.bf16.mxu0 0
    %1304 = vmatpush1.bf16.msra.mxu0 %v1211
    %1305 = vmatprep.subr.bf16.mxu0 0
    %1306 = vmatpush1.bf16.msra.mxu0 %v1212
    %1307 = vmatprep.subr.bf16.mxu0 0
    %1308 = vmatpush1.bf16.msra.mxu0 %v1213
    %1309 = vmatprep.subr.bf16.mxu0 0
    %1310 = vmatpush1.bf16.msra.mxu0 %v1214
    %1311 = vmatprep.subr.bf16.mxu0 0
    %1312 = vmatpush1.bf16.msra.mxu0 %v1215
    %1313 = vmatprep.subr.bf16.mxu0 0
    %1314 = vmatpush1.bf16.msra.mxu0 %v1216
    %1315 = vmatprep.subr.bf16.mxu0 0
    %1316 = vmatpush1.bf16.msra.mxu0 %v1217
    %1317 = vmatprep.subr.bf16.mxu0 0
    %1318 = vmatpush1.bf16.msra.mxu0 %v1218
    %1319 = vmatprep.subr.bf16.mxu0 0
    %1320 = vmatpush1.bf16.msra.mxu0 %v1219
    %1321 = vmatprep.subr.bf16.mxu0 0
    %1322 = vmatpush1.bf16.msra.mxu0 %v1220
    %1323 = vmatprep.subr.bf16.mxu0 0
    %1324 = vmatpush1.bf16.msra.mxu0 %v1221
    %1325 = vmatprep.subr.bf16.mxu0 0
    %1326 = vmatpush1.bf16.msra.mxu0 %v1222
    %1327 = vmatprep.mubr.bf16.mxu0 %v991
    %1328 = vmatmul.mubr.bf16.gmra.mrb[0].mxu0 %v990
    %v1329 = vpop.f32.mrb[0].mxu0
    %v1330 = vadd.f32 %v1290, %v1329
    %v1331 = vpop.f32.mrb[0].mxu0
    %v1332 = vpop.f32.mrb[0].mxu0
    %v1333 = vpop.f32.mrb[0].mxu0
    %1334 = vdwg.mxu0
    %v1335 = vxor.u32 %v1330, 2147483648
    %v1336 = vmul.f32 %v1335, 1.442695
    %v1337 = vpow.pop %v1336
    %v1338 = vadd.f32 %v1337, 1.0
    %v1339 = vrcp.pop %v1338
    %v1340 = vmul.f32 1.0, %v1339
    %1341 = vst [vmem:[#allocation4] sm:$0xff] %v1340
    // Predicated region
    $region38: #{autoencoder_forward.1} parent=1 // pred_check
      _
    $region39: #{autoencoder_forward.1} parent=1 // pred_check_branch
      %1343 = sbr.rel (0) target = $region41
    $region40: #{autoencoder_forward.1} parent=1 // pred_region
      %s1345 = ssub.s32 128, 128
      %1346 = vsyncadd [#allocation3], %s1345
      %s1348 = sshll.u32 [#allocation2], 4
      %s1349 = int_to_ptr.vmem [resolvable:$true] %s1348
      %1351 = dma.vmem_to_hbm [thread:$0]  %s1349, 128, %s9, [#allocation3]
    $region41: #{autoencoder_forward.1} parent=1 // pred_fallthru
      _
    // Predicated region
    $region42: #{autoencoder_forward.1} parent=1 // pred_check
      _
    $region43: #{autoencoder_forward.1} parent=1 // pred_check_branch
      %1353 = sbr.rel (0) target = $region45
    $region44: #{autoencoder_forward.1} parent=1 // pred_region
      %s1355 = ssub.s32 128, 128
      %1356 = vsyncadd [#allocation5], %s1355
      %s1358 = sshll.u32 [#allocation4], 4
      %s1359 = int_to_ptr.vmem [resolvable:$true] %s1358
      %1361 = dma.vmem_to_hbm [thread:$0]  %s1359, 128, %s10, [#allocation5]
    $region45: #{autoencoder_forward.1} parent=1 // pred_fallthru
      _
    // Predicated region
    $region46: #{autoencoder_forward.1} parent=1 // pred_check
      _
    $region47: #{autoencoder_forward.1} parent=1 // pred_check_branch
      %1363 = sbr.rel (0) target = $region49
    $region48: #{autoencoder_forward.1} parent=1 // pred_region
      %1364 = dma.done [#allocation3], 128
    $region49: #{autoencoder_forward.1} parent=1 // pred_fallthru
      _
    // Predicated region
    $region50: #{autoencoder_forward.1} parent=1 // pred_check
      _
    $region51: #{autoencoder_forward.1} parent=1 // pred_check_branch
      %1366 = sbr.rel (0) target = $region53
    $region52: #{autoencoder_forward.1} parent=1 // pred_region
      %1367 = dma.done [#allocation5], 128
    $region53: #{autoencoder_forward.1} parent=1 // pred_fallthru
      _
    %1368 = vsyncpa [#allocation3], 1
    %1369 = vsyncpa [#allocation5], 1

</llo_original>
